<compile_context>
chip_gen: v7x
topology: tpu7x:2x2x1
jax: 0.10.0
libtpu: 0.0.40
codegen_flags: <defaults>
</compile_context>

<pallas_src>
import functools
import math

import jax
import jax.numpy as jnp
from jax.experimental import pallas as pl
from jax.experimental.pallas import tpu as pltpu


# ---------------------------------------------------------------------------
# Fused LSTM kernel: token ids -> (all hidden states, c_n) for one batch tile
# ---------------------------------------------------------------------------
def encoder_lstm_kernel(tok_ref, proj_ref, whh_ref, out_ref, cn_ref,
                        *, tb, seq, hidden):
    H = hidden
    b0 = pl.program_id(0) * tb                      # global batch offset

    w_hh = whh_ref[...]                             # (H, 4H)

    # In-kernel gather of the precomputed per-token input projections:
    #   xp[b, t, :] = (emb @ W_ih^T + b_ih + b_hh)[tokens[b0+b, t], :]
    # Token ids live in SMEM (scalar prefetch); each row is a dynamic
    # leading-axis load of the VMEM-resident (V, 1, 4H) table.
    xp = []                                         # seq entries of (tb, 4H)
    for t in range(seq):
        rows = [proj_ref[tok_ref[b0 + b, t]] for b in range(tb)]  # (1, 4H) each
        xp.append(rows[0] if tb == 1 else jnp.concatenate(rows, axis=0))

    h = jnp.zeros((tb, H), jnp.float32)
    c = jnp.zeros((tb, H), jnp.float32)
    hs = []
    # Inherently sequential time recurrence; S is small and static, so a full
    # unroll gives the LLO scheduler maximal visibility.
    # TODO(synk): switch to lax.fori_loop(..., unroll=k) if S grows large.
    for t in range(seq):
        gates = xp[t] + jnp.dot(h, w_hh, preferred_element_type=jnp.float32)
        # Full-width EUP passes over all 4H=128 lanes, then slice the gates
        # (PyTorch order: i, f, g, o).
        sig = jax.nn.sigmoid(gates)
        tnh = jnp.tanh(gates)
        i = sig[:, 0 * H:1 * H]
        f = sig[:, 1 * H:2 * H]
        g = tnh[:, 2 * H:3 * H]
        o = sig[:, 3 * H:4 * H]
        c = f * c + i * g
        h = o * jnp.tanh(c)
        hs.append(h)

    # One lane-dense store of every timestep: (tb, S*H), S*H multiple of 128.
    out_ref[...] = jnp.concatenate(hs, axis=-1)[None]
    cn_ref[...] = c[None]


# ---------------------------------------------------------------------------
# Wrapper: scalar-prefetch tokens + pallas_call, reshape to PyTorch layout
# ---------------------------------------------------------------------------
def encoder_forward(params, tokens):
    proj = params['proj']                           # (V, 1, 4H) folded table
    w_hh = params['w_hh']                           # (H, 4H)
    B, S = tokens.shape
    V, _, four_h = proj.shape
    H = four_h // 4

    # Two "parallel" batch tiles: uses both TensorCores on v7x; on 1-TC chips
    # it is just a 2-step serial loop (inputs DMA'd once, ~0.35us extra).
    num_tiles = 2 if (B >= 2 and B % 2 == 0) else 1
    tb = B // num_tiles

    kernel = functools.partial(encoder_lstm_kernel, tb=tb, seq=S, hidden=H)

    cost = pl.CostEstimate(
        flops=2 * B * S * H * four_h + 10 * B * S * H,
        transcendentals=B * S * (2 * four_h + H),
        bytes_accessed=(tokens.size * 4 + proj.size * 4 + w_hh.size * 4
                        + B * S * H * 4 + B * H * 4),
    )

    out_flat, c_n = pl.pallas_call(
        kernel,
        out_shape=(jax.ShapeDtypeStruct((num_tiles, tb, S * H), jnp.float32),
                   jax.ShapeDtypeStruct((num_tiles, tb, H), jnp.float32)),
        grid_spec=pltpu.PrefetchScalarGridSpec(
            num_scalar_prefetch=1,                  # token ids -> SMEM
            grid=(num_tiles,),
            in_specs=[
                pl.BlockSpec((V, 1, four_h), lambda i, tok: (0, 0, 0)),  # table
                pl.BlockSpec((H, four_h), lambda i, tok: (0, 0)),        # W_hh^T
            ],
            out_specs=[
                pl.BlockSpec((1, tb, S * H), lambda i, tok: (i, 0, 0)),  # all h_t
                pl.BlockSpec((1, tb, H), lambda i, tok: (i, 0, 0)),      # c_n
            ],
        ),
        compiler_params=pltpu.CompilerParams(
            dimension_semantics=("parallel",)),
        cost_estimate=cost,
    )(tokens.astype(jnp.int32), proj, w_hh)

    out = out_flat.reshape(B, S, H)
    # Single-layer, unidirectional LSTM: h_n is exactly the last output step.
    h_n = out[:, -1, :][None]
    c_n = c_n.reshape(B, H)[None]
    return out, (h_n, c_n)


# ---------------------------------------------------------------------------
# Deterministic parameter construction (matches nn.Embedding + nn.LSTM shapes)
# ---------------------------------------------------------------------------
def init_params(key, input_size, hidden_size):
    k_emb, k_wih, k_whh, k_bih, k_bhh = jax.random.split(key, 5)

    emb = jax.random.normal(k_emb, (input_size, hidden_size), jnp.float32)

    bound = 1.0 / math.sqrt(hidden_size)            # PyTorch LSTM default init
    w_ih = jax.random.uniform(k_wih, (4 * hidden_size, hidden_size),
                              jnp.float32, -bound, bound)
    w_hh = jax.random.uniform(k_whh, (4 * hidden_size, hidden_size),
                              jnp.float32, -bound, bound)
    b_ih = jax.random.uniform(k_bih, (4 * hidden_size,), jnp.float32,
                              -bound, bound)
    b_hh = jax.random.uniform(k_bhh, (4 * hidden_size,), jnp.float32,
                              -bound, bound)

    # Eval-mode fold: dropout(p=0.5) is identity, so the embedding lookup and
    # the input projection commute into one per-token table:
    #   proj[v] = emb[v] @ W_ih^T + b_ih + b_hh      -> (V, 4H), gate order ifgo
    # TODO(synk): training-mode dropout would invalidate this fold and needs an
    # in-kernel pltpu.prng_random_bits mask on the embedded x before W_ih.
    proj = emb @ w_ih.T + (b_ih + b_hh)[None, :]
    return dict(
        proj=proj.reshape(input_size, 1, 4 * hidden_size),   # (V, 1, 4H)
        w_hh=jnp.transpose(w_hh),                            # (H, 4H)
    )


if __name__ == "__main__":
    INPUT_SIZE = 16      # vocab size for nn.Embedding
    HIDDEN = 32          # hidden_size (embedding dim == LSTM hidden)
    B, S = 2, 8

    root = jax.random.PRNGKey(0)
    k_params, k_tok = jax.random.split(root)

    params = init_params(k_params, INPUT_SIZE, HIDDEN)
    tokens = jax.random.randint(k_tok, (B, S), 0, INPUT_SIZE, dtype=jnp.int32)

    out, (h_n, c_n) = encoder_forward(params, tokens)
    out = jax.block_until_ready(out)
    jax.block_until_ready((h_n, c_n))

    assert out.shape == (B, S, HIDDEN)
    assert h_n.shape == (1, B, HIDDEN)
    assert c_n.shape == (1, B, HIDDEN)
    print("KERNEL_OK")
</pallas_src>

<mosaic_0001>
module attributes {stable_mosaic.version = 11 : i64} {
  func.func @encoder_lstm_kernel(%arg0: i32, %arg1: memref<2x8xi32, #tpu.memory_space<smem>>, %arg2: memref<16x1x128xf32, #tpu.memory_space<vmem>>, %arg3: memref<32x128xf32, #tpu.memory_space<vmem>>, %arg4: memref<1x1x256xf32, #tpu.memory_space<vmem>>, %arg5: memref<1x1x32xf32, #tpu.memory_space<vmem>>) attributes {dimension_semantics = [#tpu.dimension_semantics<parallel>], iteration_bounds = array<i64: 2>, scalar_prefetch = 1 : i64, scratch_operands = 0 : i64, tpu.core_type = #tpu.core_type<tc>, window_params = [{pipeline_mode = #tpu.pipeline_mode<synchronous>, transform_indices = @transform_0, window_bounds = array<i64: 16, 1, 128>}, {pipeline_mode = #tpu.pipeline_mode<synchronous>, transform_indices = @transform_1, window_bounds = array<i64: 32, 128>}, {transform_indices = @transform_2, window_bounds = array<i64: 1, 1, 256>}, {transform_indices = @transform_3, window_bounds = array<i64: 1, 1, 32>}]} {
    %c1_i32 = arith.constant 1 : i32
    %0 = arith.muli %arg0, %c1_i32 : i32
    %c0 = arith.constant 0 : index
    %c0_0 = arith.constant 0 : index
    %1 = vector.load %arg3[%c0, %c0_0] : memref<32x128xf32, #tpu.memory_space<vmem>>, vector<32x128xf32>
    %c0_i32 = arith.constant 0 : i32
    %2 = arith.addi %0, %c0_i32 : i32
    %3 = arith.index_cast %2 : i32 to index
    %c0_1 = arith.constant 0 : index
    %4 = memref.load %arg1[%3, %c0_1] : memref<2x8xi32, #tpu.memory_space<smem>>
    %5 = arith.index_cast %4 : i32 to index
    %c0_2 = arith.constant 0 : index
    %c0_3 = arith.constant 0 : index
    %6 = vector.load %arg2[%5, %c0_2, %c0_3] : memref<16x1x128xf32, #tpu.memory_space<vmem>>, vector<1x1x128xf32>
    %7 = vector.shape_cast %6 : vector<1x1x128xf32> to vector<1x128xf32>
    %c0_i32_4 = arith.constant 0 : i32
    %8 = arith.addi %0, %c0_i32_4 : i32
    %9 = arith.index_cast %8 : i32 to index
    %c1 = arith.constant 1 : index
    %10 = memref.load %arg1[%9, %c1] : memref<2x8xi32, #tpu.memory_space<smem>>
    %11 = arith.index_cast %10 : i32 to index
    %c0_5 = arith.constant 0 : index
    %c0_6 = arith.constant 0 : index
    %12 = vector.load %arg2[%11, %c0_5, %c0_6] : memref<16x1x128xf32, #tpu.memory_space<vmem>>, vector<1x1x128xf32>
    %13 = vector.shape_cast %12 : vector<1x1x128xf32> to vector<1x128xf32>
    %c0_i32_7 = arith.constant 0 : i32
    %14 = arith.addi %0, %c0_i32_7 : i32
    %15 = arith.index_cast %14 : i32 to index
    %c2 = arith.constant 2 : index
    %16 = memref.load %arg1[%15, %c2] : memref<2x8xi32, #tpu.memory_space<smem>>
    %17 = arith.index_cast %16 : i32 to index
    %c0_8 = arith.constant 0 : index
    %c0_9 = arith.constant 0 : index
    %18 = vector.load %arg2[%17, %c0_8, %c0_9] : memref<16x1x128xf32, #tpu.memory_space<vmem>>, vector<1x1x128xf32>
    %19 = vector.shape_cast %18 : vector<1x1x128xf32> to vector<1x128xf32>
    %c0_i32_10 = arith.constant 0 : i32
    %20 = arith.addi %0, %c0_i32_10 : i32
    %21 = arith.index_cast %20 : i32 to index
    %c3 = arith.constant 3 : index
    %22 = memref.load %arg1[%21, %c3] : memref<2x8xi32, #tpu.memory_space<smem>>
    %23 = arith.index_cast %22 : i32 to index
    %c0_11 = arith.constant 0 : index
    %c0_12 = arith.constant 0 : index
    %24 = vector.load %arg2[%23, %c0_11, %c0_12] : memref<16x1x128xf32, #tpu.memory_space<vmem>>, vector<1x1x128xf32>
    %25 = vector.shape_cast %24 : vector<1x1x128xf32> to vector<1x128xf32>
    %c0_i32_13 = arith.constant 0 : i32
    %26 = arith.addi %0, %c0_i32_13 : i32
    %27 = arith.index_cast %26 : i32 to index
    %c4 = arith.constant 4 : index
    %28 = memref.load %arg1[%27, %c4] : memref<2x8xi32, #tpu.memory_space<smem>>
    %29 = arith.index_cast %28 : i32 to index
    %c0_14 = arith.constant 0 : index
    %c0_15 = arith.constant 0 : index
    %30 = vector.load %arg2[%29, %c0_14, %c0_15] : memref<16x1x128xf32, #tpu.memory_space<vmem>>, vector<1x1x128xf32>
    %31 = vector.shape_cast %30 : vector<1x1x128xf32> to vector<1x128xf32>
    %c0_i32_16 = arith.constant 0 : i32
    %32 = arith.addi %0, %c0_i32_16 : i32
    %33 = arith.index_cast %32 : i32 to index
    %c5 = arith.constant 5 : index
    %34 = memref.load %arg1[%33, %c5] : memref<2x8xi32, #tpu.memory_space<smem>>
    %35 = arith.index_cast %34 : i32 to index
    %c0_17 = arith.constant 0 : index
    %c0_18 = arith.constant 0 : index
    %36 = vector.load %arg2[%35, %c0_17, %c0_18] : memref<16x1x128xf32, #tpu.memory_space<vmem>>, vector<1x1x128xf32>
    %37 = vector.shape_cast %36 : vector<1x1x128xf32> to vector<1x128xf32>
    %c0_i32_19 = arith.constant 0 : i32
    %38 = arith.addi %0, %c0_i32_19 : i32
    %39 = arith.index_cast %38 : i32 to index
    %c6 = arith.constant 6 : index
    %40 = memref.load %arg1[%39, %c6] : memref<2x8xi32, #tpu.memory_space<smem>>
    %41 = arith.index_cast %40 : i32 to index
    %c0_20 = arith.constant 0 : index
    %c0_21 = arith.constant 0 : index
    %42 = vector.load %arg2[%41, %c0_20, %c0_21] : memref<16x1x128xf32, #tpu.memory_space<vmem>>, vector<1x1x128xf32>
    %43 = vector.shape_cast %42 : vector<1x1x128xf32> to vector<1x128xf32>
    %c0_i32_22 = arith.constant 0 : i32
    %44 = arith.addi %0, %c0_i32_22 : i32
    %45 = arith.index_cast %44 : i32 to index
    %c7 = arith.constant 7 : index
    %46 = memref.load %arg1[%45, %c7] : memref<2x8xi32, #tpu.memory_space<smem>>
    %47 = arith.index_cast %46 : i32 to index
    %c0_23 = arith.constant 0 : index
    %c0_24 = arith.constant 0 : index
    %48 = vector.load %arg2[%47, %c0_23, %c0_24] : memref<16x1x128xf32, #tpu.memory_space<vmem>>, vector<1x1x128xf32>
    %49 = vector.shape_cast %48 : vector<1x1x128xf32> to vector<1x128xf32>
    %cst = arith.constant 0.000000e+00 : f32
    %50 = vector.broadcast %cst : f32 to vector<1x32xf32>
    %cst_25 = arith.constant 0.000000e+00 : f32
    %51 = vector.broadcast %cst_25 : f32 to vector<1x32xf32>
    %cst_26 = arith.constant dense<0.000000e+00> : vector<1x128xf32>
    %52 = tpu.matmul %50, %1, %cst_26 {dimension_numbers = #tpu.dot_dimension_numbers<[1], [0], [0], [1], [0, 0, 1, 1], [], []>} : vector<1x32xf32>, vector<32x128xf32>, vector<1x128xf32> -> vector<1x128xf32>
    %53 = arith.addf %7, %52 : vector<1x128xf32>
    %54 = arith.negf %53 : vector<1x128xf32>
    %55 = math.exp %54 : vector<1x128xf32>
    %cst_27 = arith.constant 1.000000e+00 : f32
    %56 = vector.broadcast %cst_27 : f32 to vector<1x128xf32>
    %57 = arith.addf %56, %55 : vector<1x128xf32>
    %58 = arith.divf %56, %57 : vector<1x128xf32>
    %59 = math.tanh %53 : vector<1x128xf32>
    %60 = vector.extract_strided_slice %58 {offsets = [0, 0], sizes = [1, 32], strides = [1, 1]} : vector<1x128xf32> to vector<1x32xf32>
    %61 = vector.extract_strided_slice %58 {offsets = [0, 32], sizes = [1, 32], strides = [1, 1]} : vector<1x128xf32> to vector<1x32xf32>
    %62 = vector.extract_strided_slice %59 {offsets = [0, 64], sizes = [1, 32], strides = [1, 1]} : vector<1x128xf32> to vector<1x32xf32>
    %63 = vector.extract_strided_slice %58 {offsets = [0, 96], sizes = [1, 32], strides = [1, 1]} : vector<1x128xf32> to vector<1x32xf32>
    %64 = arith.mulf %61, %51 : vector<1x32xf32>
    %65 = arith.mulf %60, %62 : vector<1x32xf32>
    %66 = arith.addf %64, %65 : vector<1x32xf32>
    %67 = math.tanh %66 : vector<1x32xf32>
    %68 = arith.mulf %63, %67 : vector<1x32xf32>
    %cst_28 = arith.constant dense<0.000000e+00> : vector<1x128xf32>
    %69 = tpu.matmul %68, %1, %cst_28 {dimension_numbers = #tpu.dot_dimension_numbers<[1], [0], [0], [1], [0, 0, 1, 1], [], []>} : vector<1x32xf32>, vector<32x128xf32>, vector<1x128xf32> -> vector<1x128xf32>
    %70 = arith.addf %13, %69 : vector<1x128xf32>
    %71 = arith.negf %70 : vector<1x128xf32>
    %72 = math.exp %71 : vector<1x128xf32>
    %cst_29 = arith.constant 1.000000e+00 : f32
    %73 = vector.broadcast %cst_29 : f32 to vector<1x128xf32>
    %74 = arith.addf %73, %72 : vector<1x128xf32>
    %75 = arith.divf %73, %74 : vector<1x128xf32>
    %76 = math.tanh %70 : vector<1x128xf32>
    %77 = vector.extract_strided_slice %75 {offsets = [0, 0], sizes = [1, 32], strides = [1, 1]} : vector<1x128xf32> to vector<1x32xf32>
    %78 = vector.extract_strided_slice %75 {offsets = [0, 32], sizes = [1, 32], strides = [1, 1]} : vector<1x128xf32> to vector<1x32xf32>
    %79 = vector.extract_strided_slice %76 {offsets = [0, 64], sizes = [1, 32], strides = [1, 1]} : vector<1x128xf32> to vector<1x32xf32>
    %80 = vector.extract_strided_slice %75 {offsets = [0, 96], sizes = [1, 32], strides = [1, 1]} : vector<1x128xf32> to vector<1x32xf32>
    %81 = arith.mulf %78, %66 : vector<1x32xf32>
    %82 = arith.mulf %77, %79 : vector<1x32xf32>
    %83 = arith.addf %81, %82 : vector<1x32xf32>
    %84 = math.tanh %83 : vector<1x32xf32>
    %85 = arith.mulf %80, %84 : vector<1x32xf32>
    %cst_30 = arith.constant dense<0.000000e+00> : vector<1x128xf32>
    %86 = tpu.matmul %85, %1, %cst_30 {dimension_numbers = #tpu.dot_dimension_numbers<[1], [0], [0], [1], [0, 0, 1, 1], [], []>} : vector<1x32xf32>, vector<32x128xf32>, vector<1x128xf32> -> vector<1x128xf32>
    %87 = arith.addf %19, %86 : vector<1x128xf32>
    %88 = arith.negf %87 : vector<1x128xf32>
    %89 = math.exp %88 : vector<1x128xf32>
    %cst_31 = arith.constant 1.000000e+00 : f32
    %90 = vector.broadcast %cst_31 : f32 to vector<1x128xf32>
    %91 = arith.addf %90, %89 : vector<1x128xf32>
    %92 = arith.divf %90, %91 : vector<1x128xf32>
    %93 = math.tanh %87 : vector<1x128xf32>
    %94 = vector.extract_strided_slice %92 {offsets = [0, 0], sizes = [1, 32], strides = [1, 1]} : vector<1x128xf32> to vector<1x32xf32>
    %95 = vector.extract_strided_slice %92 {offsets = [0, 32], sizes = [1, 32], strides = [1, 1]} : vector<1x128xf32> to vector<1x32xf32>
    %96 = vector.extract_strided_slice %93 {offsets = [0, 64], sizes = [1, 32], strides = [1, 1]} : vector<1x128xf32> to vector<1x32xf32>
    %97 = vector.extract_strided_slice %92 {offsets = [0, 96], sizes = [1, 32], strides = [1, 1]} : vector<1x128xf32> to vector<1x32xf32>
    %98 = arith.mulf %95, %83 : vector<1x32xf32>
    %99 = arith.mulf %94, %96 : vector<1x32xf32>
    %100 = arith.addf %98, %99 : vector<1x32xf32>
    %101 = math.tanh %100 : vector<1x32xf32>
    %102 = arith.mulf %97, %101 : vector<1x32xf32>
    %cst_32 = arith.constant dense<0.000000e+00> : vector<1x128xf32>
    %103 = tpu.matmul %102, %1, %cst_32 {dimension_numbers = #tpu.dot_dimension_numbers<[1], [0], [0], [1], [0, 0, 1, 1], [], []>} : vector<1x32xf32>, vector<32x128xf32>, vector<1x128xf32> -> vector<1x128xf32>
    %104 = arith.addf %25, %103 : vector<1x128xf32>
    %105 = arith.negf %104 : vector<1x128xf32>
    %106 = math.exp %105 : vector<1x128xf32>
    %cst_33 = arith.constant 1.000000e+00 : f32
    %107 = vector.broadcast %cst_33 : f32 to vector<1x128xf32>
    %108 = arith.addf %107, %106 : vector<1x128xf32>
    %109 = arith.divf %107, %108 : vector<1x128xf32>
    %110 = math.tanh %104 : vector<1x128xf32>
    %111 = vector.extract_strided_slice %109 {offsets = [0, 0], sizes = [1, 32], strides = [1, 1]} : vector<1x128xf32> to vector<1x32xf32>
    %112 = vector.extract_strided_slice %109 {offsets = [0, 32], sizes = [1, 32], strides = [1, 1]} : vector<1x128xf32> to vector<1x32xf32>
    %113 = vector.extract_strided_slice %110 {offsets = [0, 64], sizes = [1, 32], strides = [1, 1]} : vector<1x128xf32> to vector<1x32xf32>
    %114 = vector.extract_strided_slice %109 {offsets = [0, 96], sizes = [1, 32], strides = [1, 1]} : vector<1x128xf32> to vector<1x32xf32>
    %115 = arith.mulf %112, %100 : vector<1x32xf32>
    %116 = arith.mulf %111, %113 : vector<1x32xf32>
    %117 = arith.addf %115, %116 : vector<1x32xf32>
    %118 = math.tanh %117 : vector<1x32xf32>
    %119 = arith.mulf %114, %118 : vector<1x32xf32>
    %cst_34 = arith.constant dense<0.000000e+00> : vector<1x128xf32>
    %120 = tpu.matmul %119, %1, %cst_34 {dimension_numbers = #tpu.dot_dimension_numbers<[1], [0], [0], [1], [0, 0, 1, 1], [], []>} : vector<1x32xf32>, vector<32x128xf32>, vector<1x128xf32> -> vector<1x128xf32>
    %121 = arith.addf %31, %120 : vector<1x128xf32>
    %122 = arith.negf %121 : vector<1x128xf32>
    %123 = math.exp %122 : vector<1x128xf32>
    %cst_35 = arith.constant 1.000000e+00 : f32
    %124 = vector.broadcast %cst_35 : f32 to vector<1x128xf32>
    %125 = arith.addf %124, %123 : vector<1x128xf32>
    %126 = arith.divf %124, %125 : vector<1x128xf32>
    %127 = math.tanh %121 : vector<1x128xf32>
    %128 = vector.extract_strided_slice %126 {offsets = [0, 0], sizes = [1, 32], strides = [1, 1]} : vector<1x128xf32> to vector<1x32xf32>
    %129 = vector.extract_strided_slice %126 {offsets = [0, 32], sizes = [1, 32], strides = [1, 1]} : vector<1x128xf32> to vector<1x32xf32>
    %130 = vector.extract_strided_slice %127 {offsets = [0, 64], sizes = [1, 32], strides = [1, 1]} : vector<1x128xf32> to vector<1x32xf32>
    %131 = vector.extract_strided_slice %126 {offsets = [0, 96], sizes = [1, 32], strides = [1, 1]} : vector<1x128xf32> to vector<1x32xf32>
    %132 = arith.mulf %129, %117 : vector<1x32xf32>
    %133 = arith.mulf %128, %130 : vector<1x32xf32>
    %134 = arith.addf %132, %133 : vector<1x32xf32>
    %135 = math.tanh %134 : vector<1x32xf32>
    %136 = arith.mulf %131, %135 : vector<1x32xf32>
    %cst_36 = arith.constant dense<0.000000e+00> : vector<1x128xf32>
    %137 = tpu.matmul %136, %1, %cst_36 {dimension_numbers = #tpu.dot_dimension_numbers<[1], [0], [0], [1], [0, 0, 1, 1], [], []>} : vector<1x32xf32>, vector<32x128xf32>, vector<1x128xf32> -> vector<1x128xf32>
    %138 = arith.addf %37, %137 : vector<1x128xf32>
    %139 = arith.negf %138 : vector<1x128xf32>
    %140 = math.exp %139 : vector<1x128xf32>
    %cst_37 = arith.constant 1.000000e+00 : f32
    %141 = vector.broadcast %cst_37 : f32 to vector<1x128xf32>
    %142 = arith.addf %141, %140 : vector<1x128xf32>
    %143 = arith.divf %141, %142 : vector<1x128xf32>
    %144 = math.tanh %138 : vector<1x128xf32>
    %145 = vector.extract_strided_slice %143 {offsets = [0, 0], sizes = [1, 32], strides = [1, 1]} : vector<1x128xf32> to vector<1x32xf32>
    %146 = vector.extract_strided_slice %143 {offsets = [0, 32], sizes = [1, 32], strides = [1, 1]} : vector<1x128xf32> to vector<1x32xf32>
    %147 = vector.extract_strided_slice %144 {offsets = [0, 64], sizes = [1, 32], strides = [1, 1]} : vector<1x128xf32> to vector<1x32xf32>
    %148 = vector.extract_strided_slice %143 {offsets = [0, 96], sizes = [1, 32], strides = [1, 1]} : vector<1x128xf32> to vector<1x32xf32>
    %149 = arith.mulf %146, %134 : vector<1x32xf32>
    %150 = arith.mulf %145, %147 : vector<1x32xf32>
    %151 = arith.addf %149, %150 : vector<1x32xf32>
    %152 = math.tanh %151 : vector<1x32xf32>
    %153 = arith.mulf %148, %152 : vector<1x32xf32>
    %cst_38 = arith.constant dense<0.000000e+00> : vector<1x128xf32>
    %154 = tpu.matmul %153, %1, %cst_38 {dimension_numbers = #tpu.dot_dimension_numbers<[1], [0], [0], [1], [0, 0, 1, 1], [], []>} : vector<1x32xf32>, vector<32x128xf32>, vector<1x128xf32> -> vector<1x128xf32>
    %155 = arith.addf %43, %154 : vector<1x128xf32>
    %156 = arith.negf %155 : vector<1x128xf32>
    %157 = math.exp %156 : vector<1x128xf32>
    %cst_39 = arith.constant 1.000000e+00 : f32
    %158 = vector.broadcast %cst_39 : f32 to vector<1x128xf32>
    %159 = arith.addf %158, %157 : vector<1x128xf32>
    %160 = arith.divf %158, %159 : vector<1x128xf32>
    %161 = math.tanh %155 : vector<1x128xf32>
    %162 = vector.extract_strided_slice %160 {offsets = [0, 0], sizes = [1, 32], strides = [1, 1]} : vector<1x128xf32> to vector<1x32xf32>
    %163 = vector.extract_strided_slice %160 {offsets = [0, 32], sizes = [1, 32], strides = [1, 1]} : vector<1x128xf32> to vector<1x32xf32>
    %164 = vector.extract_strided_slice %161 {offsets = [0, 64], sizes = [1, 32], strides = [1, 1]} : vector<1x128xf32> to vector<1x32xf32>
    %165 = vector.extract_strided_slice %160 {offsets = [0, 96], sizes = [1, 32], strides = [1, 1]} : vector<1x128xf32> to vector<1x32xf32>
    %166 = arith.mulf %163, %151 : vector<1x32xf32>
    %167 = arith.mulf %162, %164 : vector<1x32xf32>
    %168 = arith.addf %166, %167 : vector<1x32xf32>
    %169 = math.tanh %168 : vector<1x32xf32>
    %170 = arith.mulf %165, %169 : vector<1x32xf32>
    %cst_40 = arith.constant dense<0.000000e+00> : vector<1x128xf32>
    %171 = tpu.matmul %170, %1, %cst_40 {dimension_numbers = #tpu.dot_dimension_numbers<[1], [0], [0], [1], [0, 0, 1, 1], [], []>} : vector<1x32xf32>, vector<32x128xf32>, vector<1x128xf32> -> vector<1x128xf32>
    %172 = arith.addf %49, %171 : vector<1x128xf32>
    %173 = arith.negf %172 : vector<1x128xf32>
    %174 = math.exp %173 : vector<1x128xf32>
    %cst_41 = arith.constant 1.000000e+00 : f32
    %175 = vector.broadcast %cst_41 : f32 to vector<1x128xf32>
    %176 = arith.addf %175, %174 : vector<1x128xf32>
    %177 = arith.divf %175, %176 : vector<1x128xf32>
    %178 = math.tanh %172 : vector<1x128xf32>
    %179 = vector.extract_strided_slice %177 {offsets = [0, 0], sizes = [1, 32], strides = [1, 1]} : vector<1x128xf32> to vector<1x32xf32>
    %180 = vector.extract_strided_slice %177 {offsets = [0, 32], sizes = [1, 32], strides = [1, 1]} : vector<1x128xf32> to vector<1x32xf32>
    %181 = vector.extract_strided_slice %178 {offsets = [0, 64], sizes = [1, 32], strides = [1, 1]} : vector<1x128xf32> to vector<1x32xf32>
    %182 = vector.extract_strided_slice %177 {offsets = [0, 96], sizes = [1, 32], strides = [1, 1]} : vector<1x128xf32> to vector<1x32xf32>
    %183 = arith.mulf %180, %168 : vector<1x32xf32>
    %184 = arith.mulf %179, %181 : vector<1x32xf32>
    %185 = arith.addf %183, %184 : vector<1x32xf32>
    %186 = math.tanh %185 : vector<1x32xf32>
    %187 = arith.mulf %182, %186 : vector<1x32xf32>
    %188 = tpu.concatenate %68, %85, %102, %119, %136, %153, %170, %187 in 1 : vector<1x32xf32>, vector<1x32xf32>, vector<1x32xf32>, vector<1x32xf32>, vector<1x32xf32>, vector<1x32xf32>, vector<1x32xf32>, vector<1x32xf32> -> vector<1x256xf32>
    %189 = vector.shape_cast %188 : vector<1x256xf32> to vector<1x1x256xf32>
    %c0_42 = arith.constant 0 : index
    %c0_43 = arith.constant 0 : index
    %c0_44 = arith.constant 0 : index
    %190 = vector.load %arg4[%c0_42, %c0_43, %c0_44] : memref<1x1x256xf32, #tpu.memory_space<vmem>>, vector<1x1x256xf32>
    tpu.vector_store %arg4[%c0_42, %c0_43, %c0_44], %189 {strides = array<i32>} : memref<1x1x256xf32, #tpu.memory_space<vmem>>, vector<1x1x256xf32>,
    %191 = vector.shape_cast %185 : vector<1x32xf32> to vector<1x1x32xf32>
    %c0_45 = arith.constant 0 : index
    %c0_46 = arith.constant 0 : index
    %c0_47 = arith.constant 0 : index
    %192 = vector.load %arg5[%c0_45, %c0_46, %c0_47] : memref<1x1x32xf32, #tpu.memory_space<vmem>>, vector<1x1x32xf32>
    tpu.vector_store %arg5[%c0_45, %c0_46, %c0_47], %191 {strides = array<i32>} : memref<1x1x32xf32, #tpu.memory_space<vmem>>, vector<1x1x32xf32>,
    return
  }
  func.func @transform_0(%arg0: i32, %arg1: memref<2x8xi32, #tpu.memory_space<smem>>) -> (i32, i32, i32) {
    %c0_i32 = arith.constant 0 : i32
    %c0_i32_0 = arith.constant 0 : i32
    %c0_i32_1 = arith.constant 0 : i32
    %c0_i32_2 = arith.constant 0 : i32
    return %c0_i32, %c0_i32_0, %c0_i32_1 : i32, i32, i32
  }
  func.func @transform_1(%arg0: i32, %arg1: memref<2x8xi32, #tpu.memory_space<smem>>) -> (i32, i32) {
    %c0_i32 = arith.constant 0 : i32
    %c0_i32_0 = arith.constant 0 : i32
    %c0_i32_1 = arith.constant 0 : i32
    return %c0_i32, %c0_i32_0 : i32, i32
  }
  func.func @transform_2(%arg0: i32, %arg1: memref<2x8xi32, #tpu.memory_space<smem>>) -> (i32, i32, i32) {
    %c0_i32 = arith.constant 0 : i32
    %c0_i32_0 = arith.constant 0 : i32
    %c0_i32_1 = arith.constant 0 : i32
    return %arg0, %c0_i32, %c0_i32_0 : i32, i32, i32
  }
  func.func @transform_3(%arg0: i32, %arg1: memref<2x8xi32, #tpu.memory_space<smem>>) -> (i32, i32, i32) {
    %c0_i32 = arith.constant 0 : i32
    %c0_i32_0 = arith.constant 0 : i32
    %c0_i32_1 = arith.constant 0 : i32
    return %arg0, %c0_i32, %c0_i32_0 : i32, i32, i32
  }
}

</mosaic_0001>

<llo_original>
// kernel: tpu_custom_call.1
$region0: #{tpu_custom_call.1}
  #allocation0 [shape = 'u32[]', space=smem, size = 0x4, offset = 0x4, fixed_abs, tag = 'smem constant byte address 0x4 - core index']
  #allocation1 [shape = 'u32[144,128]{1,0:T(1,128)}', space=vmem, size = 0x12000, scoped, tag = 'internal scratch']
  #allocation2 [shape = 's32[1]{0}', space=sflag, size = 0x4, scoped, tag = 'scoped memory for tpu_custom_call.1']
  #allocation3 [shape = 'u8[1024]{0}', space=smem, size = 0x400, scoped, tag = 'prefetched SMEM operand 0']
  %s0 = inlined_call_operand.hbm [shape: s32[2,8], index: 0, kind: input, shape index: {}]
  %s1 = inlined_call_operand.hbm [shape: f32[16,1,128], index: 1, kind: input, shape index: {}]
  %s2 = inlined_call_operand.hbm [shape: f32[32,128], index: 2, kind: input, shape index: {}]
  %s3 = inlined_call_operand.hbm [shape: f32[2,1,256], index: 3, kind: output, shape index: {0}]
  %s4 = inlined_call_operand.hbm [shape: f32[2,1,32], index: 4, kind: output, shape index: {1}]
  %5 = xla_tuple %s3, %s4
  %s6 = sld [smem:[#allocation0]]
  $region57: #{tpu_custom_call.1} parent=0
    _
  %s8 = ssub.s32 1, %s6
  %s9 = scalar_select 0, %s8, %s6
  %11 = dma.hbm_to_smem %s0, 32, [#allocation3], [#allocation2]
  %12 = dma.done [#allocation2], 32
  %13 = sfence
  $region1: #{tpu_custom_call.1} parent=0
    #allocation4 [shape = 'u8[8192]{0}', space=vmem, size = 0x2000, scoped, tag = 'input window, operand 1, single buffered']
    #allocation5 [shape = 's32[2]{0}', space=sflag, size = 0x8, scoped, tag = 'scoped memory for tpu_custom_call.1']
    #allocation6 [shape = 's32[2]{0}', space=sflag, size = 0x8, scoped, tag = 'scoped memory for tpu_custom_call.1']
    #allocation7 [shape = 'u8[16384]{0}', space=vmem, size = 0x4000, scoped, tag = 'input window, operand 2, single buffered']
    #allocation8 [shape = 's32[1]{0}', space=sflag, size = 0x4, scoped, tag = 'scoped memory for tpu_custom_call.1']
    #allocation9 [shape = 'u8[2048]{0}', space=vmem, size = 0x800, scoped, tag = 'output window, operand 0']
    #allocation10 [shape = 'u8[1024]{0}', space=vmem, size = 0x400, scoped, tag = 'output window, operand 1']
    #allocation11 [shape = 's32[2]{0}', space=sflag, size = 0x8, scoped, tag = 'scoped memory for tpu_custom_call.1']
    %14 = vsyncpa [#allocation5], 0
    %15 = vsyncpa [#allocation8], 0
    %16 = vsyncpa [#allocation6], 0
    %s17 = scalar_lea.sflag [#allocation6], 1
    %18 = vsyncpa %s17, 0
    %19 = vsyncpa [#allocation11], 0
    %s20 = scalar_lea.sflag [#allocation11], 1
    %21 = vsyncpa %s20, 0
    loop: start=0, step=1, limit=4
    $region2: #{tpu_custom_call.1} parent=1 // loop_pre_header
      _
    $region3: #{tpu_custom_call.1} parent=1 // loop_header
      %s23 = sphi 0, %s27
      %p24 = scmp.ge.s32.totalorder %s23, 4
      %s31 = sphi 0, %s31
      %s33 = sphi 0, %s31
      %s34 = sphi 0, %s33
      %s48 = sphi 0, %s34
      %s52 = sphi 0, %s52
      %s54 = sphi 0, %s52
      %s55 = sphi 0, %s54
      %s69 = sphi 0, %s55
      %s75 = sphi 0, %s77
      %s78 = sphi 0, %s75
      %s79 = sphi 0, %s78
      %s95 = sphi 0, %s79
      %s101 = sphi 0, %s103
      %s104 = sphi 0, %s101
      %s105 = sphi 0, %s104
      %s121 = sphi 0, %s105
    $region4: #{tpu_custom_call.1} parent=1 // loop_header_branch
      %26 = sbr.rel (%p24) target = $region8
    $region5: #{tpu_custom_call.1} parent=1 // loop_body
      %s28 = ssub.s32 %s23, 1
      %s29 = ssub.s32 %s23, 2
      %s30 = sadd.s32 %s23, 1
      %s32 = sadd.s32 %s31, 1
      %p35 = scmp.eq.s32.totalorder %s23, 1
      %p36 = scmp.ne.s32.totalorder %s31, %s33
      %p37 = scmp.eq.s32.totalorder %s23, 0
      %p38 = por %p36, %p37
      %p39 = scmp.ne.s32.totalorder %s31, %s33
      %p40 = scmp.eq.s32.totalorder %s28, 1
      %p41 = por %p39, %p40
      %p42 = scmp.ne.s32.totalorder %s33, %s34
      %p43 = scmp.eq.s32.totalorder %s28, 0
      %p44 = por %p42, %p43
      %p45 = scmp.ne.s32.totalorder %s33, %s34
      %p46 = scmp.eq.s32.totalorder %s29, 1
      %p47 = por %p45, %p46
      %p49 = scmp.ne.s32.totalorder %s34, %s48
      %p50 = scmp.eq.s32.totalorder %s29, 0
      %p51 = por %p49, %p50
      %s53 = sadd.s32 %s52, 1
      %p56 = scmp.eq.s32.totalorder %s23, 1
      %p57 = scmp.ne.s32.totalorder %s52, %s54
      %p58 = scmp.eq.s32.totalorder %s23, 0
      %p59 = por %p57, %p58
      %p60 = scmp.ne.s32.totalorder %s52, %s54
      %p61 = scmp.eq.s32.totalorder %s28, 1
      %p62 = por %p60, %p61
      %p63 = scmp.ne.s32.totalorder %s54, %s55
      %p64 = scmp.eq.s32.totalorder %s28, 0
      %p65 = por %p63, %p64
      %p66 = scmp.ne.s32.totalorder %s54, %s55
      %p67 = scmp.eq.s32.totalorder %s29, 1
      %p68 = por %p66, %p67
      %p70 = scmp.ne.s32.totalorder %s55, %s69
      %p71 = scmp.eq.s32.totalorder %s29, 0
      %p72 = por %p70, %p71
      %s73 = ssub.s32 %s23, %s30
      %p74 = scmp.eq.s32.totalorder %s73, 0
      %s76 = sadd.s32 %s75, 1
      %s77 = scalar_select %p74, %s75, %s76
      %p80 = pneg %p74
      %p81 = scmp.eq.s32.totalorder %s23, 1
      %p82 = por %p80, %p81
      %p83 = scmp.ne.s32.totalorder %s75, %s78
      %p84 = scmp.eq.s32.totalorder %s23, 0
      %p85 = por %p83, %p84
      %p86 = scmp.ne.s32.totalorder %s75, %s78
      %p87 = scmp.eq.s32.totalorder %s28, 1
      %p88 = por %p86, %p87
      %p89 = scmp.ne.s32.totalorder %s78, %s79
      %p90 = scmp.eq.s32.totalorder %s28, 0
      %p91 = por %p89, %p90
      %p92 = scmp.ne.s32.totalorder %s78, %s79
      %p93 = scmp.eq.s32.totalorder %s29, 1
      %p94 = por %p92, %p93
      %p96 = scmp.ne.s32.totalorder %s79, %s95
      %p97 = scmp.eq.s32.totalorder %s29, 0
      %p98 = por %p96, %p97
      %s99 = ssub.s32 %s23, %s30
      %p100 = scmp.eq.s32.totalorder %s99, 0
      %s102 = sadd.s32 %s101, 1
      %s103 = scalar_select %p100, %s101, %s102
      %p106 = pneg %p100
      %p107 = scmp.eq.s32.totalorder %s23, 1
      %p108 = por %p106, %p107
      %p109 = scmp.ne.s32.totalorder %s101, %s104
      %p110 = scmp.eq.s32.totalorder %s23, 0
      %p111 = por %p109, %p110
      %p112 = scmp.ne.s32.totalorder %s101, %s104
      %p113 = scmp.eq.s32.totalorder %s28, 1
      %p114 = por %p112, %p113
      %p115 = scmp.ne.s32.totalorder %s104, %s105
      %p116 = scmp.eq.s32.totalorder %s28, 0
      %p117 = por %p115, %p116
      %p118 = scmp.ne.s32.totalorder %s104, %s105
      %p119 = scmp.eq.s32.totalorder %s29, 1
      %p120 = por %p118, %p119
      %p122 = scmp.ne.s32.totalorder %s105, %s121
      %p123 = scmp.eq.s32.totalorder %s29, 0
      %p124 = por %p122, %p123
      %p125 = scmp.le.s32.totalorder 1, %s23
      %p126 = scmp.lt.s32.totalorder %s23, 3
      %p127 = pnand %p125, %p126
      %p128 = pneg %p127
      // Predicated region
      $region9: #{tpu_custom_call.1} parent=5 // pred_check
        _
      $region10: #{tpu_custom_call.1} parent=5 // pred_check_branch
        %130 = sbr.rel (%p127) target = $region12
      $region11: #{tpu_custom_call.1} parent=5 // pred_region
        %s131 = ssub.s32 %s23, 1
        // Predicated region
        $region13: #{tpu_custom_call.1} parent=11 // pred_check
          %p132 = pneg %p44
        $region14: #{tpu_custom_call.1} parent=11 // pred_check_branch
          %134 = sbr.rel (%p132) target = $region16
        $region15: #{tpu_custom_call.1} parent=11 // pred_region
          %s136 = ssub.s32 256, 256
          %137 = vsyncadd [#allocation5], %s136
          %s138 = sshll.u32 [#allocation4], 4
          %s139 = int_to_ptr.vmem [resolvable:$true] %s138
          %144 = dma.hbm_to_vmem [thread:$0]  %s1, 256, %s139, [#allocation5], 16, 16, 1
        $region16: #{tpu_custom_call.1} parent=11 // pred_fallthru
          _
        // Predicated region
        $region17: #{tpu_custom_call.1} parent=11 // pred_check
          %p145 = pneg %p65
        $region18: #{tpu_custom_call.1} parent=11 // pred_check_branch
          %147 = sbr.rel (%p145) target = $region20
        $region19: #{tpu_custom_call.1} parent=11 // pred_region
          %s149 = ssub.s32 512, 512
          %150 = vsyncadd [#allocation8], %s149
          %s151 = sshll.u32 [#allocation7], 4
          %s152 = int_to_ptr.vmem [resolvable:$true] %s151
          %157 = dma.hbm_to_vmem [thread:$0]  %s2, 512, %s152, [#allocation8], 128, 128, 8
        $region20: #{tpu_custom_call.1} parent=11 // pred_fallthru
          _
      $region12: #{tpu_custom_call.1} parent=5 // pred_fallthru
        _
      %p158 = scmp.lt.s32.totalorder %s23, 2
      // Predicated region
      $region21: #{tpu_custom_call.1} parent=5 // pred_check
        %p159 = pneg %p158
      $region22: #{tpu_custom_call.1} parent=5 // pred_check_branch
        %161 = sbr.rel (%p159) target = $region24
      $region23: #{tpu_custom_call.1} parent=5 // pred_region
        _
      $region24: #{tpu_custom_call.1} parent=5 // pred_fallthru
        _
      %p162 = scmp.le.s32.totalorder 1, %s23
      %p163 = scmp.lt.s32.totalorder %s23, 3
      %p164 = pnand %p162, %p163
      %p165 = pneg %p164
      // Predicated region
      $region25: #{tpu_custom_call.1} parent=5 // pred_check
        _
      $region26: #{tpu_custom_call.1} parent=5 // pred_check_branch
        %167 = sbr.rel (%p164) target = $region28
      $region27: #{tpu_custom_call.1} parent=5 // pred_region
        %s168 = ssub.s32 %s23, 1
        // Predicated region
        $region29: #{tpu_custom_call.1} parent=27 // pred_check
          %p169 = pneg %p44
        $region30: #{tpu_custom_call.1} parent=27 // pred_check_branch
          %171 = sbr.rel (%p169) target = $region32
        $region31: #{tpu_custom_call.1} parent=27 // pred_region
          %172 = dma.done [#allocation5], 256
        $region32: #{tpu_custom_call.1} parent=27 // pred_fallthru
          _
        // Predicated region
        $region33: #{tpu_custom_call.1} parent=27 // pred_check
          %p173 = pneg %p65
        $region34: #{tpu_custom_call.1} parent=27 // pred_check_branch
          %175 = sbr.rel (%p173) target = $region36
        $region35: #{tpu_custom_call.1} parent=27 // pred_region
          %176 = dma.done [#allocation8], 512
        $region36: #{tpu_custom_call.1} parent=27 // pred_fallthru
          _
        %p177 = pneg %p44
        %p178 = pneg %p41
        %p179 = pneg %p65
        %p180 = pneg %p62
        %p181 = pneg %p91
        %p182 = pneg %p88
        %s183 = sand.u32 %s78, 1
        %s184 = scalar_lea.sflag [#allocation6], %s183
        %s185 = sand.u32 %s78, 1
        %s186 = smul.addr %s185, 2
        %s187 = scalar_lea.vmem [#allocation9], %s186
        %p188 = pneg %p117
        %p189 = pneg %p114
        %s190 = sand.u32 %s104, 1
        %s191 = scalar_lea.sflag [#allocation11], %s190
        %s192 = sand.u32 %s104, 1
        %s193 = scalar_lea.vmem [#allocation10], %s192
        %v194 = vld [vmem:[#allocation7] sm:$0xff]
        %v195 = vld [vmem:[#allocation7 + $0x8] sm:$0xff]
        %v196 = vld [vmem:[#allocation7 + $0x10] sm:$0xff]
        %v197 = vld [vmem:[#allocation7 + $0x18] sm:$0xff]
        %s198 = smul.u32 %s28, 128
        %s199 = sld [smem:[#allocation3 + %s198]]
        %s200 = scalar_lea.vmem [#allocation4], %s199
        %v201 = vld [vmem:[%s200] sm:$0x1]
        %s202 = sadd.s32 %s198, 1
        %s203 = sld [smem:[#allocation3 + %s202]]
        %s204 = scalar_lea.vmem [#allocation4], %s203
        %v205 = vld [vmem:[%s204] sm:$0x1]
        %s206 = sadd.s32 %s198, 2
        %s207 = sld [smem:[#allocation3 + %s206]]
        %s208 = scalar_lea.vmem [#allocation4], %s207
        %v209 = vld [vmem:[%s208] sm:$0x1]
        %s210 = sadd.s32 %s198, 3
        %s211 = sld [smem:[#allocation3 + %s210]]
        %s212 = scalar_lea.vmem [#allocation4], %s211
        %v213 = vld [vmem:[%s212] sm:$0x1]
        %s214 = sadd.s32 %s198, 4
        %s215 = sld [smem:[#allocation3 + %s214]]
        %s216 = scalar_lea.vmem [#allocation4], %s215
        %v217 = vld [vmem:[%s216] sm:$0x1]
        %s218 = sadd.s32 %s198, 5
        %s219 = sld [smem:[#allocation3 + %s218]]
        %s220 = scalar_lea.vmem [#allocation4], %s219
        %v221 = vld [vmem:[%s220] sm:$0x1]
        %s222 = sadd.s32 %s198, 6
        %s223 = sld [smem:[#allocation3 + %s222]]
        %s224 = scalar_lea.vmem [#allocation4], %s223
        %v225 = vld [vmem:[%s224] sm:$0x1]
        %s226 = sadd.s32 %s198, 7
        %s227 = sld [smem:[#allocation3 + %s226]]
        %s228 = scalar_lea.vmem [#allocation4], %s227
        %v229 = vld [vmem:[%s228] sm:$0x1]
        %vm230 = vcmask 261120
        %v232 = vsel %vm230, 0.0, 0
        %234 = vmatprep.subr.mxu0 0.0
        %235 = vmatpush1.msra.mxu0 %v194
        %236 = vmatprep.subr.mxu0 0.0
        %237 = vmatpush1.msra.mxu0 %v195
        %238 = vmatprep.subr.mxu0 0.0
        %239 = vmatpush1.msra.mxu0 %v196
        %240 = vmatprep.subr.mxu0 0.0
        %241 = vmatpush1.msra.mxu0 %v197
        %242 = vmatprep.subr.mxu0 0.0
        %243 = vmatpush1.msra.mxu0 0.0
        %244 = vmatprep.subr.mxu0 0.0
        %245 = vmatpush1.msra.mxu0 0.0
        %246 = vmatprep.subr.mxu0 0.0
        %247 = vmatpush1.msra.mxu0 0.0
        %248 = vmatprep.subr.mxu0 0.0
        %249 = vmatpush1.msra.mxu0 0.0
        %250 = vmatprep.subr.mxu0 0.0
        %251 = vmatpush1.msra.mxu0 0.0
        %252 = vmatprep.subr.mxu0 0.0
        %253 = vmatpush1.msra.mxu0 0.0
        %254 = vmatprep.subr.mxu0 0.0
        %255 = vmatpush1.msra.mxu0 0.0
        %256 = vmatprep.subr.mxu0 0.0
        %257 = vmatpush1.msra.mxu0 0.0
        %258 = vmatprep.subr.mxu0 0.0
        %259 = vmatpush1.msra.mxu0 0.0
        %260 = vmatprep.subr.mxu0 0.0
        %261 = vmatpush1.msra.mxu0 0.0
        %262 = vmatprep.subr.mxu0 0.0
        %263 = vmatpush1.msra.mxu0 0.0
        %264 = vmatprep.subr.mxu0 0.0
        %265 = vmatpush1.msra.mxu0 0.0
        %266 = vmatprep.subr.mxu0 0.0
        %267 = vmatpush1.msra.mxu0 0.0
        %268 = vmatprep.subr.mxu0 0.0
        %269 = vmatpush1.msra.mxu0 0.0
        %270 = vmatprep.subr.mxu0 0.0
        %271 = vmatpush1.msra.mxu0 0.0
        %272 = vmatprep.subr.mxu0 0.0
        %273 = vmatpush1.msra.mxu0 0.0
        %274 = vmatprep.subr.mxu0 0.0
        %275 = vmatpush1.msra.mxu0 0.0
        %276 = vmatprep.subr.mxu0 0.0
        %277 = vmatpush1.msra.mxu0 0.0
        %278 = vmatprep.subr.mxu0 0.0
        %279 = vmatpush1.msra.mxu0 0.0
        %280 = vmatprep.subr.mxu0 0.0
        %281 = vmatpush1.msra.mxu0 0.0
        %282 = vmatprep.subr.mxu0 0.0
        %283 = vmatpush1.msra.mxu0 0.0
        %284 = vmatprep.subr.mxu0 0.0
        %285 = vmatpush1.msra.mxu0 0.0
        %286 = vmatprep.subr.mxu0 0.0
        %287 = vmatpush1.msra.mxu0 0.0
        %288 = vmatprep.subr.mxu0 0.0
        %289 = vmatpush1.msra.mxu0 0.0
        %290 = vmatprep.subr.mxu0 0.0
        %291 = vmatpush1.msra.mxu0 0.0
        %292 = vmatprep.subr.mxu0 0.0
        %293 = vmatpush1.msra.mxu0 0.0
        %294 = vmatprep.subr.mxu0 0.0
        %295 = vmatpush1.msra.mxu0 0.0
        %296 = vmatprep.subr.mxu0 0.0
        %297 = vmatpush1.msra.mxu0 0.0
        %298 = vmatprep.mubr.f32.mxu0 0.0
        %299 = vmatmul.mubr.f32.gmra.mrb[0].mxu0 %v232
        %v300 = vpop.f32.mrb[0].mxu0
        %v301 = vadd.f32 0.0, %v300
        %v302 = vpop.f32.mrb[0].mxu0
        %303 = vdwg.mxu0
        %v304 = vadd.f32 %v201, %v301
        %v305 = vxor.u32 %v304, 2147483648
        %v306 = vmul.f32 %v305, 1.442695
        %v307 = vpow.pop %v306
        %v308 = vadd.f32 %v307, 1.0
        %v309 = vrcp.pop %v308
        %v310 = vmul.f32 1.0, %v309
        %v311 = vtanh.pop %v304
        %v312 = vmul.f32 %v310, 0.0
        %314 = vrot.lane.b32.xlu0 %v311, 64
        %v315 = vpop.permute.xlu0 %314
        %v317 = vmul.f32 %v310, %v315
        %319 = vrot.lane.b32.xlu0 %v317, 32
        %v320 = vpop.permute.xlu0 %319
        %v322 = vadd.f32 %v312, %v320
        %v323 = vtanh.pop %v322
        %325 = vrot.lane.b32.xlu0 %v323, 64
        %v326 = vpop.permute.xlu0 %325
        %v328 = vmul.f32 %v310, %v326
        %v330 = vlaneseq
        %v331 = vshrl.u32 %v330, 7
        %v332 = vsub.s32 0, %v331
        %v333 = vrot.slane %v328, %v332
        %334 = vrot.lane.b32.xlu0 %v333, 32
        %v335 = vpop.permute.xlu0 %334
        %v336 = vsel %vm230, %v335, 0
        %338 = vmatprep.subr.mxu0 0.0
        %339 = vmatpush1.msra.mxu0 %v194
        %340 = vmatprep.subr.mxu0 0.0
        %341 = vmatpush1.msra.mxu0 %v195
        %342 = vmatprep.subr.mxu0 0.0
        %343 = vmatpush1.msra.mxu0 %v196
        %344 = vmatprep.subr.mxu0 0.0
        %345 = vmatpush1.msra.mxu0 %v197
        %346 = vmatprep.subr.mxu0 0.0
        %347 = vmatpush1.msra.mxu0 0.0
        %348 = vmatprep.subr.mxu0 0.0
        %349 = vmatpush1.msra.mxu0 0.0
        %350 = vmatprep.subr.mxu0 0.0
        %351 = vmatpush1.msra.mxu0 0.0
        %352 = vmatprep.subr.mxu0 0.0
        %353 = vmatpush1.msra.mxu0 0.0
        %354 = vmatprep.subr.mxu0 0.0
        %355 = vmatpush1.msra.mxu0 0.0
        %356 = vmatprep.subr.mxu0 0.0
        %357 = vmatpush1.msra.mxu0 0.0
        %358 = vmatprep.subr.mxu0 0.0
        %359 = vmatpush1.msra.mxu0 0.0
        %360 = vmatprep.subr.mxu0 0.0
        %361 = vmatpush1.msra.mxu0 0.0
        %362 = vmatprep.subr.mxu0 0.0
        %363 = vmatpush1.msra.mxu0 0.0
        %364 = vmatprep.subr.mxu0 0.0
        %365 = vmatpush1.msra.mxu0 0.0
        %366 = vmatprep.subr.mxu0 0.0
        %367 = vmatpush1.msra.mxu0 0.0
        %368 = vmatprep.subr.mxu0 0.0
        %369 = vmatpush1.msra.mxu0 0.0
        %370 = vmatprep.subr.mxu0 0.0
        %371 = vmatpush1.msra.mxu0 0.0
        %372 = vmatprep.subr.mxu0 0.0
        %373 = vmatpush1.msra.mxu0 0.0
        %374 = vmatprep.subr.mxu0 0.0
        %375 = vmatpush1.msra.mxu0 0.0
        %376 = vmatprep.subr.mxu0 0.0
        %377 = vmatpush1.msra.mxu0 0.0
        %378 = vmatprep.subr.mxu0 0.0
        %379 = vmatpush1.msra.mxu0 0.0
        %380 = vmatprep.subr.mxu0 0.0
        %381 = vmatpush1.msra.mxu0 0.0
        %382 = vmatprep.subr.mxu0 0.0
        %383 = vmatpush1.msra.mxu0 0.0
        %384 = vmatprep.subr.mxu0 0.0
        %385 = vmatpush1.msra.mxu0 0.0
        %386 = vmatprep.subr.mxu0 0.0
        %387 = vmatpush1.msra.mxu0 0.0
        %388 = vmatprep.subr.mxu0 0.0
        %389 = vmatpush1.msra.mxu0 0.0
        %390 = vmatprep.subr.mxu0 0.0
        %391 = vmatpush1.msra.mxu0 0.0
        %392 = vmatprep.subr.mxu0 0.0
        %393 = vmatpush1.msra.mxu0 0.0
        %394 = vmatprep.subr.mxu0 0.0
        %395 = vmatpush1.msra.mxu0 0.0
        %396 = vmatprep.subr.mxu0 0.0
        %397 = vmatpush1.msra.mxu0 0.0
        %398 = vmatprep.subr.mxu0 0.0
        %399 = vmatpush1.msra.mxu0 0.0
        %400 = vmatprep.subr.mxu0 0.0
        %401 = vmatpush1.msra.mxu0 0.0
        %402 = vmatprep.mubr.f32.mxu0 0.0
        %403 = vmatmul.mubr.f32.gmra.mrb[0].mxu0 %v336
        %v404 = vpop.f32.mrb[0].mxu0
        %v405 = vadd.f32 0.0, %v404
        %v406 = vpop.f32.mrb[0].mxu0
        %407 = vdwg.mxu0
        %v408 = vadd.f32 %v205, %v405
        %v409 = vxor.u32 %v408, 2147483648
        %v410 = vmul.f32 %v409, 1.442695
        %v411 = vpow.pop %v410
        %v412 = vadd.f32 %v411, 1.0
        %v413 = vrcp.pop %v412
        %v414 = vmul.f32 1.0, %v413
        %v415 = vtanh.pop %v408
        %v416 = vmul.f32 %v414, %v322
        %418 = vrot.lane.b32.xlu0 %v415, 64
        %v419 = vpop.permute.xlu0 %418
        %v421 = vmul.f32 %v414, %v419
        %423 = vrot.lane.b32.xlu0 %v421, 32
        %v424 = vpop.permute.xlu0 %423
        %v426 = vadd.f32 %v416, %v424
        %v427 = vtanh.pop %v426
        %429 = vrot.lane.b32.xlu0 %v427, 64
        %v430 = vpop.permute.xlu0 %429
        %v432 = vmul.f32 %v414, %v430
        %v434 = vlaneseq
        %v435 = vshrl.u32 %v434, 7
        %v436 = vsub.s32 0, %v435
        %v437 = vrot.slane %v432, %v436
        %438 = vrot.lane.b32.xlu0 %v437, 32
        %v439 = vpop.permute.xlu0 %438
        %v440 = vsel %vm230, %v439, 0
        %442 = vmatprep.subr.mxu0 0.0
        %443 = vmatpush1.msra.mxu0 %v194
        %444 = vmatprep.subr.mxu0 0.0
        %445 = vmatpush1.msra.mxu0 %v195
        %446 = vmatprep.subr.mxu0 0.0
        %447 = vmatpush1.msra.mxu0 %v196
        %448 = vmatprep.subr.mxu0 0.0
        %449 = vmatpush1.msra.mxu0 %v197
        %450 = vmatprep.subr.mxu0 0.0
        %451 = vmatpush1.msra.mxu0 0.0
        %452 = vmatprep.subr.mxu0 0.0
        %453 = vmatpush1.msra.mxu0 0.0
        %454 = vmatprep.subr.mxu0 0.0
        %455 = vmatpush1.msra.mxu0 0.0
        %456 = vmatprep.subr.mxu0 0.0
        %457 = vmatpush1.msra.mxu0 0.0
        %458 = vmatprep.subr.mxu0 0.0
        %459 = vmatpush1.msra.mxu0 0.0
        %460 = vmatprep.subr.mxu0 0.0
        %461 = vmatpush1.msra.mxu0 0.0
        %462 = vmatprep.subr.mxu0 0.0
        %463 = vmatpush1.msra.mxu0 0.0
        %464 = vmatprep.subr.mxu0 0.0
        %465 = vmatpush1.msra.mxu0 0.0
        %466 = vmatprep.subr.mxu0 0.0
        %467 = vmatpush1.msra.mxu0 0.0
        %468 = vmatprep.subr.mxu0 0.0
        %469 = vmatpush1.msra.mxu0 0.0
        %470 = vmatprep.subr.mxu0 0.0
        %471 = vmatpush1.msra.mxu0 0.0
        %472 = vmatprep.subr.mxu0 0.0
        %473 = vmatpush1.msra.mxu0 0.0
        %474 = vmatprep.subr.mxu0 0.0
        %475 = vmatpush1.msra.mxu0 0.0
        %476 = vmatprep.subr.mxu0 0.0
        %477 = vmatpush1.msra.mxu0 0.0
        %478 = vmatprep.subr.mxu0 0.0
        %479 = vmatpush1.msra.mxu0 0.0
        %480 = vmatprep.subr.mxu0 0.0
        %481 = vmatpush1.msra.mxu0 0.0
        %482 = vmatprep.subr.mxu0 0.0
        %483 = vmatpush1.msra.mxu0 0.0
        %484 = vmatprep.subr.mxu0 0.0
        %485 = vmatpush1.msra.mxu0 0.0
        %486 = vmatprep.subr.mxu0 0.0
        %487 = vmatpush1.msra.mxu0 0.0
        %488 = vmatprep.subr.mxu0 0.0
        %489 = vmatpush1.msra.mxu0 0.0
        %490 = vmatprep.subr.mxu0 0.0
        %491 = vmatpush1.msra.mxu0 0.0
        %492 = vmatprep.subr.mxu0 0.0
        %493 = vmatpush1.msra.mxu0 0.0
        %494 = vmatprep.subr.mxu0 0.0
        %495 = vmatpush1.msra.mxu0 0.0
        %496 = vmatprep.subr.mxu0 0.0
        %497 = vmatpush1.msra.mxu0 0.0
        %498 = vmatprep.subr.mxu0 0.0
        %499 = vmatpush1.msra.mxu0 0.0
        %500 = vmatprep.subr.mxu0 0.0
        %501 = vmatpush1.msra.mxu0 0.0
        %502 = vmatprep.subr.mxu0 0.0
        %503 = vmatpush1.msra.mxu0 0.0
        %504 = vmatprep.subr.mxu0 0.0
        %505 = vmatpush1.msra.mxu0 0.0
        %506 = vmatprep.mubr.f32.mxu0 0.0
        %507 = vmatmul.mubr.f32.gmra.mrb[0].mxu0 %v440
        %v508 = vpop.f32.mrb[0].mxu0
        %v509 = vadd.f32 0.0, %v508
        %v510 = vpop.f32.mrb[0].mxu0
        %511 = vdwg.mxu0
        %v512 = vadd.f32 %v209, %v509
        %v513 = vxor.u32 %v512, 2147483648
        %v514 = vmul.f32 %v513, 1.442695
        %v515 = vpow.pop %v514
        %v516 = vadd.f32 %v515, 1.0
        %v517 = vrcp.pop %v516
        %v518 = vmul.f32 1.0, %v517
        %v519 = vtanh.pop %v512
        %v520 = vmul.f32 %v518, %v426
        %522 = vrot.lane.b32.xlu0 %v519, 64
        %v523 = vpop.permute.xlu0 %522
        %v525 = vmul.f32 %v518, %v523
        %527 = vrot.lane.b32.xlu0 %v525, 32
        %v528 = vpop.permute.xlu0 %527
        %v530 = vadd.f32 %v520, %v528
        %v531 = vtanh.pop %v530
        %533 = vrot.lane.b32.xlu0 %v531, 64
        %v534 = vpop.permute.xlu0 %533
        %v536 = vmul.f32 %v518, %v534
        %v538 = vlaneseq
        %v539 = vshrl.u32 %v538, 7
        %v540 = vsub.s32 0, %v539
        %v541 = vrot.slane %v536, %v540
        %542 = vrot.lane.b32.xlu0 %v541, 32
        %v543 = vpop.permute.xlu0 %542
        %v544 = vsel %vm230, %v543, 0
        %546 = vmatprep.subr.mxu0 0.0
        %547 = vmatpush1.msra.mxu0 %v194
        %548 = vmatprep.subr.mxu0 0.0
        %549 = vmatpush1.msra.mxu0 %v195
        %550 = vmatprep.subr.mxu0 0.0
        %551 = vmatpush1.msra.mxu0 %v196
        %552 = vmatprep.subr.mxu0 0.0
        %553 = vmatpush1.msra.mxu0 %v197
        %554 = vmatprep.subr.mxu0 0.0
        %555 = vmatpush1.msra.mxu0 0.0
        %556 = vmatprep.subr.mxu0 0.0
        %557 = vmatpush1.msra.mxu0 0.0
        %558 = vmatprep.subr.mxu0 0.0
        %559 = vmatpush1.msra.mxu0 0.0
        %560 = vmatprep.subr.mxu0 0.0
        %561 = vmatpush1.msra.mxu0 0.0
        %562 = vmatprep.subr.mxu0 0.0
        %563 = vmatpush1.msra.mxu0 0.0
        %564 = vmatprep.subr.mxu0 0.0
        %565 = vmatpush1.msra.mxu0 0.0
        %566 = vmatprep.subr.mxu0 0.0
        %567 = vmatpush1.msra.mxu0 0.0
        %568 = vmatprep.subr.mxu0 0.0
        %569 = vmatpush1.msra.mxu0 0.0
        %570 = vmatprep.subr.mxu0 0.0
        %571 = vmatpush1.msra.mxu0 0.0
        %572 = vmatprep.subr.mxu0 0.0
        %573 = vmatpush1.msra.mxu0 0.0
        %574 = vmatprep.subr.mxu0 0.0
        %575 = vmatpush1.msra.mxu0 0.0
        %576 = vmatprep.subr.mxu0 0.0
        %577 = vmatpush1.msra.mxu0 0.0
        %578 = vmatprep.subr.mxu0 0.0
        %579 = vmatpush1.msra.mxu0 0.0
        %580 = vmatprep.subr.mxu0 0.0
        %581 = vmatpush1.msra.mxu0 0.0
        %582 = vmatprep.subr.mxu0 0.0
        %583 = vmatpush1.msra.mxu0 0.0
        %584 = vmatprep.subr.mxu0 0.0
        %585 = vmatpush1.msra.mxu0 0.0
        %586 = vmatprep.subr.mxu0 0.0
        %587 = vmatpush1.msra.mxu0 0.0
        %588 = vmatprep.subr.mxu0 0.0
        %589 = vmatpush1.msra.mxu0 0.0
        %590 = vmatprep.subr.mxu0 0.0
        %591 = vmatpush1.msra.mxu0 0.0
        %592 = vmatprep.subr.mxu0 0.0
        %593 = vmatpush1.msra.mxu0 0.0
        %594 = vmatprep.subr.mxu0 0.0
        %595 = vmatpush1.msra.mxu0 0.0
        %596 = vmatprep.subr.mxu0 0.0
        %597 = vmatpush1.msra.mxu0 0.0
        %598 = vmatprep.subr.mxu0 0.0
        %599 = vmatpush1.msra.mxu0 0.0
        %600 = vmatprep.subr.mxu0 0.0
        %601 = vmatpush1.msra.mxu0 0.0
        %602 = vmatprep.subr.mxu0 0.0
        %603 = vmatpush1.msra.mxu0 0.0
        %604 = vmatprep.subr.mxu0 0.0
        %605 = vmatpush1.msra.mxu0 0.0
        %606 = vmatprep.subr.mxu0 0.0
        %607 = vmatpush1.msra.mxu0 0.0
        %608 = vmatprep.subr.mxu0 0.0
        %609 = vmatpush1.msra.mxu0 0.0
        %610 = vmatprep.mubr.f32.mxu0 0.0
        %611 = vmatmul.mubr.f32.gmra.mrb[0].mxu0 %v544
        %v612 = vpop.f32.mrb[0].mxu0
        %v613 = vadd.f32 0.0, %v612
        %v614 = vpop.f32.mrb[0].mxu0
        %615 = vdwg.mxu0
        %v616 = vadd.f32 %v213, %v613
        %v617 = vxor.u32 %v616, 2147483648
        %v618 = vmul.f32 %v617, 1.442695
        %v619 = vpow.pop %v618
        %v620 = vadd.f32 %v619, 1.0
        %v621 = vrcp.pop %v620
        %v622 = vmul.f32 1.0, %v621
        %v623 = vtanh.pop %v616
        %v624 = vmul.f32 %v622, %v530
        %626 = vrot.lane.b32.xlu0 %v623, 64
        %v627 = vpop.permute.xlu0 %626
        %v629 = vmul.f32 %v622, %v627
        %631 = vrot.lane.b32.xlu0 %v629, 32
        %v632 = vpop.permute.xlu0 %631
        %v634 = vadd.f32 %v624, %v632
        %v635 = vtanh.pop %v634
        %637 = vrot.lane.b32.xlu0 %v635, 64
        %v638 = vpop.permute.xlu0 %637
        %v640 = vmul.f32 %v622, %v638
        %v642 = vlaneseq
        %v643 = vshrl.u32 %v642, 7
        %v644 = vsub.s32 0, %v643
        %v645 = vrot.slane %v640, %v644
        %646 = vrot.lane.b32.xlu0 %v645, 32
        %v647 = vpop.permute.xlu0 %646
        %v648 = vsel %vm230, %v647, 0
        %650 = vmatprep.subr.mxu0 0.0
        %651 = vmatpush1.msra.mxu0 %v194
        %652 = vmatprep.subr.mxu0 0.0
        %653 = vmatpush1.msra.mxu0 %v195
        %654 = vmatprep.subr.mxu0 0.0
        %655 = vmatpush1.msra.mxu0 %v196
        %656 = vmatprep.subr.mxu0 0.0
        %657 = vmatpush1.msra.mxu0 %v197
        %658 = vmatprep.subr.mxu0 0.0
        %659 = vmatpush1.msra.mxu0 0.0
        %660 = vmatprep.subr.mxu0 0.0
        %661 = vmatpush1.msra.mxu0 0.0
        %662 = vmatprep.subr.mxu0 0.0
        %663 = vmatpush1.msra.mxu0 0.0
        %664 = vmatprep.subr.mxu0 0.0
        %665 = vmatpush1.msra.mxu0 0.0
        %666 = vmatprep.subr.mxu0 0.0
        %667 = vmatpush1.msra.mxu0 0.0
        %668 = vmatprep.subr.mxu0 0.0
        %669 = vmatpush1.msra.mxu0 0.0
        %670 = vmatprep.subr.mxu0 0.0
        %671 = vmatpush1.msra.mxu0 0.0
        %672 = vmatprep.subr.mxu0 0.0
        %673 = vmatpush1.msra.mxu0 0.0
        %674 = vmatprep.subr.mxu0 0.0
        %675 = vmatpush1.msra.mxu0 0.0
        %676 = vmatprep.subr.mxu0 0.0
        %677 = vmatpush1.msra.mxu0 0.0
        %678 = vmatprep.subr.mxu0 0.0
        %679 = vmatpush1.msra.mxu0 0.0
        %680 = vmatprep.subr.mxu0 0.0
        %681 = vmatpush1.msra.mxu0 0.0
        %682 = vmatprep.subr.mxu0 0.0
        %683 = vmatpush1.msra.mxu0 0.0
        %684 = vmatprep.subr.mxu0 0.0
        %685 = vmatpush1.msra.mxu0 0.0
        %686 = vmatprep.subr.mxu0 0.0
        %687 = vmatpush1.msra.mxu0 0.0
        %688 = vmatprep.subr.mxu0 0.0
        %689 = vmatpush1.msra.mxu0 0.0
        %690 = vmatprep.subr.mxu0 0.0
        %691 = vmatpush1.msra.mxu0 0.0
        %692 = vmatprep.subr.mxu0 0.0
        %693 = vmatpush1.msra.mxu0 0.0
        %694 = vmatprep.subr.mxu0 0.0
        %695 = vmatpush1.msra.mxu0 0.0
        %696 = vmatprep.subr.mxu0 0.0
        %697 = vmatpush1.msra.mxu0 0.0
        %698 = vmatprep.subr.mxu0 0.0
        %699 = vmatpush1.msra.mxu0 0.0
        %700 = vmatprep.subr.mxu0 0.0
        %701 = vmatpush1.msra.mxu0 0.0
        %702 = vmatprep.subr.mxu0 0.0
        %703 = vmatpush1.msra.mxu0 0.0
        %704 = vmatprep.subr.mxu0 0.0
        %705 = vmatpush1.msra.mxu0 0.0
        %706 = vmatprep.subr.mxu0 0.0
        %707 = vmatpush1.msra.mxu0 0.0
        %708 = vmatprep.subr.mxu0 0.0
        %709 = vmatpush1.msra.mxu0 0.0
        %710 = vmatprep.subr.mxu0 0.0
        %711 = vmatpush1.msra.mxu0 0.0
        %712 = vmatprep.subr.mxu0 0.0
        %713 = vmatpush1.msra.mxu0 0.0
        %714 = vmatprep.mubr.f32.mxu0 0.0
        %715 = vmatmul.mubr.f32.gmra.mrb[0].mxu0 %v648
        %v716 = vpop.f32.mrb[0].mxu0
        %v717 = vadd.f32 0.0, %v716
        %v718 = vpop.f32.mrb[0].mxu0
        %719 = vdwg.mxu0
        %v720 = vadd.f32 %v217, %v717
        %v721 = vxor.u32 %v720, 2147483648
        %v722 = vmul.f32 %v721, 1.442695
        %v723 = vpow.pop %v722
        %v724 = vadd.f32 %v723, 1.0
        %v725 = vrcp.pop %v724
        %v726 = vmul.f32 1.0, %v725
        %v727 = vtanh.pop %v720
        %v728 = vmul.f32 %v726, %v634
        %730 = vrot.lane.b32.xlu0 %v727, 64
        %v731 = vpop.permute.xlu0 %730
        %v733 = vmul.f32 %v726, %v731
        %735 = vrot.lane.b32.xlu0 %v733, 32
        %v736 = vpop.permute.xlu0 %735
        %v738 = vadd.f32 %v728, %v736
        %v739 = vtanh.pop %v738
        %741 = vrot.lane.b32.xlu0 %v739, 64
        %v742 = vpop.permute.xlu0 %741
        %v744 = vmul.f32 %v726, %v742
        %v746 = vlaneseq
        %v747 = vshrl.u32 %v746, 7
        %v748 = vsub.s32 0, %v747
        %v749 = vrot.slane %v744, %v748
        %750 = vrot.lane.b32.xlu0 %v749, 32
        %v751 = vpop.permute.xlu0 %750
        %v752 = vsel %vm230, %v751, 0
        %754 = vmatprep.subr.mxu0 0.0
        %755 = vmatpush1.msra.mxu0 %v194
        %756 = vmatprep.subr.mxu0 0.0
        %757 = vmatpush1.msra.mxu0 %v195
        %758 = vmatprep.subr.mxu0 0.0
        %759 = vmatpush1.msra.mxu0 %v196
        %760 = vmatprep.subr.mxu0 0.0
        %761 = vmatpush1.msra.mxu0 %v197
        %762 = vmatprep.subr.mxu0 0.0
        %763 = vmatpush1.msra.mxu0 0.0
        %764 = vmatprep.subr.mxu0 0.0
        %765 = vmatpush1.msra.mxu0 0.0
        %766 = vmatprep.subr.mxu0 0.0
        %767 = vmatpush1.msra.mxu0 0.0
        %768 = vmatprep.subr.mxu0 0.0
        %769 = vmatpush1.msra.mxu0 0.0
        %770 = vmatprep.subr.mxu0 0.0
        %771 = vmatpush1.msra.mxu0 0.0
        %772 = vmatprep.subr.mxu0 0.0
        %773 = vmatpush1.msra.mxu0 0.0
        %774 = vmatprep.subr.mxu0 0.0
        %775 = vmatpush1.msra.mxu0 0.0
        %776 = vmatprep.subr.mxu0 0.0
        %777 = vmatpush1.msra.mxu0 0.0
        %778 = vmatprep.subr.mxu0 0.0
        %779 = vmatpush1.msra.mxu0 0.0
        %780 = vmatprep.subr.mxu0 0.0
        %781 = vmatpush1.msra.mxu0 0.0
        %782 = vmatprep.subr.mxu0 0.0
        %783 = vmatpush1.msra.mxu0 0.0
        %784 = vmatprep.subr.mxu0 0.0
        %785 = vmatpush1.msra.mxu0 0.0
        %786 = vmatprep.subr.mxu0 0.0
        %787 = vmatpush1.msra.mxu0 0.0
        %788 = vmatprep.subr.mxu0 0.0
        %789 = vmatpush1.msra.mxu0 0.0
        %790 = vmatprep.subr.mxu0 0.0
        %791 = vmatpush1.msra.mxu0 0.0
        %792 = vmatprep.subr.mxu0 0.0
        %793 = vmatpush1.msra.mxu0 0.0
        %794 = vmatprep.subr.mxu0 0.0
        %795 = vmatpush1.msra.mxu0 0.0
        %796 = vmatprep.subr.mxu0 0.0
        %797 = vmatpush1.msra.mxu0 0.0
        %798 = vmatprep.subr.mxu0 0.0
        %799 = vmatpush1.msra.mxu0 0.0
        %800 = vmatprep.subr.mxu0 0.0
        %801 = vmatpush1.msra.mxu0 0.0
        %802 = vmatprep.subr.mxu0 0.0
        %803 = vmatpush1.msra.mxu0 0.0
        %804 = vmatprep.subr.mxu0 0.0
        %805 = vmatpush1.msra.mxu0 0.0
        %806 = vmatprep.subr.mxu0 0.0
        %807 = vmatpush1.msra.mxu0 0.0
        %808 = vmatprep.subr.mxu0 0.0
        %809 = vmatpush1.msra.mxu0 0.0
        %810 = vmatprep.subr.mxu0 0.0
        %811 = vmatpush1.msra.mxu0 0.0
        %812 = vmatprep.subr.mxu0 0.0
        %813 = vmatpush1.msra.mxu0 0.0
        %814 = vmatprep.subr.mxu0 0.0
        %815 = vmatpush1.msra.mxu0 0.0
        %816 = vmatprep.subr.mxu0 0.0
        %817 = vmatpush1.msra.mxu0 0.0
        %818 = vmatprep.mubr.f32.mxu0 0.0
        %819 = vmatmul.mubr.f32.gmra.mrb[0].mxu0 %v752
        %v820 = vpop.f32.mrb[0].mxu0
        %v821 = vadd.f32 0.0, %v820
        %v822 = vpop.f32.mrb[0].mxu0
        %823 = vdwg.mxu0
        %v824 = vadd.f32 %v221, %v821
        %v825 = vxor.u32 %v824, 2147483648
        %v826 = vmul.f32 %v825, 1.442695
        %v827 = vpow.pop %v826
        %v828 = vadd.f32 %v827, 1.0
        %v829 = vrcp.pop %v828
        %v830 = vmul.f32 1.0, %v829
        %v831 = vtanh.pop %v824
        %v832 = vmul.f32 %v830, %v738
        %834 = vrot.lane.b32.xlu0 %v831, 64
        %v835 = vpop.permute.xlu0 %834
        %v837 = vmul.f32 %v830, %v835
        %839 = vrot.lane.b32.xlu0 %v837, 32
        %v840 = vpop.permute.xlu0 %839
        %v842 = vadd.f32 %v832, %v840
        %v843 = vtanh.pop %v842
        %845 = vrot.lane.b32.xlu0 %v843, 64
        %v846 = vpop.permute.xlu0 %845
        %v848 = vmul.f32 %v830, %v846
        %v850 = vlaneseq
        %v851 = vshrl.u32 %v850, 7
        %v852 = vsub.s32 0, %v851
        %v853 = vrot.slane %v848, %v852
        %854 = vrot.lane.b32.xlu0 %v853, 32
        %v855 = vpop.permute.xlu0 %854
        %v856 = vsel %vm230, %v855, 0
        %858 = vmatprep.subr.mxu0 0.0
        %859 = vmatpush1.msra.mxu0 %v194
        %860 = vmatprep.subr.mxu0 0.0
        %861 = vmatpush1.msra.mxu0 %v195
        %862 = vmatprep.subr.mxu0 0.0
        %863 = vmatpush1.msra.mxu0 %v196
        %864 = vmatprep.subr.mxu0 0.0
        %865 = vmatpush1.msra.mxu0 %v197
        %866 = vmatprep.subr.mxu0 0.0
        %867 = vmatpush1.msra.mxu0 0.0
        %868 = vmatprep.subr.mxu0 0.0
        %869 = vmatpush1.msra.mxu0 0.0
        %870 = vmatprep.subr.mxu0 0.0
        %871 = vmatpush1.msra.mxu0 0.0
        %872 = vmatprep.subr.mxu0 0.0
        %873 = vmatpush1.msra.mxu0 0.0
        %874 = vmatprep.subr.mxu0 0.0
        %875 = vmatpush1.msra.mxu0 0.0
        %876 = vmatprep.subr.mxu0 0.0
        %877 = vmatpush1.msra.mxu0 0.0
        %878 = vmatprep.subr.mxu0 0.0
        %879 = vmatpush1.msra.mxu0 0.0
        %880 = vmatprep.subr.mxu0 0.0
        %881 = vmatpush1.msra.mxu0 0.0
        %882 = vmatprep.subr.mxu0 0.0
        %883 = vmatpush1.msra.mxu0 0.0
        %884 = vmatprep.subr.mxu0 0.0
        %885 = vmatpush1.msra.mxu0 0.0
        %886 = vmatprep.subr.mxu0 0.0
        %887 = vmatpush1.msra.mxu0 0.0
        %888 = vmatprep.subr.mxu0 0.0
        %889 = vmatpush1.msra.mxu0 0.0
        %890 = vmatprep.subr.mxu0 0.0
        %891 = vmatpush1.msra.mxu0 0.0
        %892 = vmatprep.subr.mxu0 0.0
        %893 = vmatpush1.msra.mxu0 0.0
        %894 = vmatprep.subr.mxu0 0.0
        %895 = vmatpush1.msra.mxu0 0.0
        %896 = vmatprep.subr.mxu0 0.0
        %897 = vmatpush1.msra.mxu0 0.0
        %898 = vmatprep.subr.mxu0 0.0
        %899 = vmatpush1.msra.mxu0 0.0
        %900 = vmatprep.subr.mxu0 0.0
        %901 = vmatpush1.msra.mxu0 0.0
        %902 = vmatprep.subr.mxu0 0.0
        %903 = vmatpush1.msra.mxu0 0.0
        %904 = vmatprep.subr.mxu0 0.0
        %905 = vmatpush1.msra.mxu0 0.0
        %906 = vmatprep.subr.mxu0 0.0
        %907 = vmatpush1.msra.mxu0 0.0
        %908 = vmatprep.subr.mxu0 0.0
        %909 = vmatpush1.msra.mxu0 0.0
        %910 = vmatprep.subr.mxu0 0.0
        %911 = vmatpush1.msra.mxu0 0.0
        %912 = vmatprep.subr.mxu0 0.0
        %913 = vmatpush1.msra.mxu0 0.0
        %914 = vmatprep.subr.mxu0 0.0
        %915 = vmatpush1.msra.mxu0 0.0
        %916 = vmatprep.subr.mxu0 0.0
        %917 = vmatpush1.msra.mxu0 0.0
        %918 = vmatprep.subr.mxu0 0.0
        %919 = vmatpush1.msra.mxu0 0.0
        %920 = vmatprep.subr.mxu0 0.0
        %921 = vmatpush1.msra.mxu0 0.0
        %922 = vmatprep.mubr.f32.mxu0 0.0
        %923 = vmatmul.mubr.f32.gmra.mrb[0].mxu0 %v856
        %v924 = vpop.f32.mrb[0].mxu0
        %v925 = vadd.f32 0.0, %v924
        %v926 = vpop.f32.mrb[0].mxu0
        %927 = vdwg.mxu0
        %v928 = vadd.f32 %v225, %v925
        %v929 = vxor.u32 %v928, 2147483648
        %v930 = vmul.f32 %v929, 1.442695
        %v931 = vpow.pop %v930
        %v932 = vadd.f32 %v931, 1.0
        %v933 = vrcp.pop %v932
        %v934 = vmul.f32 1.0, %v933
        %v935 = vtanh.pop %v928
        %v936 = vmul.f32 %v934, %v842
        %938 = vrot.lane.b32.xlu0 %v935, 64
        %v939 = vpop.permute.xlu0 %938
        %v941 = vmul.f32 %v934, %v939
        %943 = vrot.lane.b32.xlu0 %v941, 32
        %v944 = vpop.permute.xlu0 %943
        %v946 = vadd.f32 %v936, %v944
        %v947 = vtanh.pop %v946
        %949 = vrot.lane.b32.xlu0 %v947, 64
        %v950 = vpop.permute.xlu0 %949
        %v952 = vmul.f32 %v934, %v950
        %v954 = vlaneseq
        %v955 = vshrl.u32 %v954, 7
        %v956 = vsub.s32 0, %v955
        %v957 = vrot.slane %v952, %v956
        %958 = vrot.lane.b32.xlu0 %v957, 32
        %v959 = vpop.permute.xlu0 %958
        %v960 = vsel %vm230, %v959, 0
        %962 = vmatprep.subr.mxu0 0.0
        %963 = vmatpush1.msra.mxu0 %v194
        %964 = vmatprep.subr.mxu0 0.0
        %965 = vmatpush1.msra.mxu0 %v195
        %966 = vmatprep.subr.mxu0 0.0
        %967 = vmatpush1.msra.mxu0 %v196
        %968 = vmatprep.subr.mxu0 0.0
        %969 = vmatpush1.msra.mxu0 %v197
        %970 = vmatprep.subr.mxu0 0.0
        %971 = vmatpush1.msra.mxu0 0.0
        %972 = vmatprep.subr.mxu0 0.0
        %973 = vmatpush1.msra.mxu0 0.0
        %974 = vmatprep.subr.mxu0 0.0
        %975 = vmatpush1.msra.mxu0 0.0
        %976 = vmatprep.subr.mxu0 0.0
        %977 = vmatpush1.msra.mxu0 0.0
        %978 = vmatprep.subr.mxu0 0.0
        %979 = vmatpush1.msra.mxu0 0.0
        %980 = vmatprep.subr.mxu0 0.0
        %981 = vmatpush1.msra.mxu0 0.0
        %982 = vmatprep.subr.mxu0 0.0
        %983 = vmatpush1.msra.mxu0 0.0
        %984 = vmatprep.subr.mxu0 0.0
        %985 = vmatpush1.msra.mxu0 0.0
        %986 = vmatprep.subr.mxu0 0.0
        %987 = vmatpush1.msra.mxu0 0.0
        %988 = vmatprep.subr.mxu0 0.0
        %989 = vmatpush1.msra.mxu0 0.0
        %990 = vmatprep.subr.mxu0 0.0
        %991 = vmatpush1.msra.mxu0 0.0
        %992 = vmatprep.subr.mxu0 0.0
        %993 = vmatpush1.msra.mxu0 0.0
        %994 = vmatprep.subr.mxu0 0.0
        %995 = vmatpush1.msra.mxu0 0.0
        %996 = vmatprep.subr.mxu0 0.0
        %997 = vmatpush1.msra.mxu0 0.0
        %998 = vmatprep.subr.mxu0 0.0
        %999 = vmatpush1.msra.mxu0 0.0
        %1000 = vmatprep.subr.mxu0 0.0
        %1001 = vmatpush1.msra.mxu0 0.0
        %1002 = vmatprep.subr.mxu0 0.0
        %1003 = vmatpush1.msra.mxu0 0.0
        %1004 = vmatprep.subr.mxu0 0.0
        %1005 = vmatpush1.msra.mxu0 0.0
        %1006 = vmatprep.subr.mxu0 0.0
        %1007 = vmatpush1.msra.mxu0 0.0
        %1008 = vmatprep.subr.mxu0 0.0
        %1009 = vmatpush1.msra.mxu0 0.0
        %1010 = vmatprep.subr.mxu0 0.0
        %1011 = vmatpush1.msra.mxu0 0.0
        %1012 = vmatprep.subr.mxu0 0.0
        %1013 = vmatpush1.msra.mxu0 0.0
        %1014 = vmatprep.subr.mxu0 0.0
        %1015 = vmatpush1.msra.mxu0 0.0
        %1016 = vmatprep.subr.mxu0 0.0
        %1017 = vmatpush1.msra.mxu0 0.0
        %1018 = vmatprep.subr.mxu0 0.0
        %1019 = vmatpush1.msra.mxu0 0.0
        %1020 = vmatprep.subr.mxu0 0.0
        %1021 = vmatpush1.msra.mxu0 0.0
        %1022 = vmatprep.subr.mxu0 0.0
        %1023 = vmatpush1.msra.mxu0 0.0
        %1024 = vmatprep.subr.mxu0 0.0
        %1025 = vmatpush1.msra.mxu0 0.0
        %1026 = vmatprep.mubr.f32.mxu0 0.0
        %1027 = vmatmul.mubr.f32.gmra.mrb[0].mxu0 %v960
        %v1028 = vpop.f32.mrb[0].mxu0
        %v1029 = vadd.f32 0.0, %v1028
        %v1030 = vpop.f32.mrb[0].mxu0
        %1031 = vdwg.mxu0
        %v1032 = vadd.f32 %v229, %v1029
        %v1033 = vxor.u32 %v1032, 2147483648
        %v1034 = vmul.f32 %v1033, 1.442695
        %v1035 = vpow.pop %v1034
        %v1036 = vadd.f32 %v1035, 1.0
        %v1037 = vrcp.pop %v1036
        %v1038 = vmul.f32 1.0, %v1037
        %v1039 = vtanh.pop %v1032
        %v1040 = vmul.f32 %v1038, %v946
        %1042 = vrot.lane.b32.xlu0 %v1039, 64
        %v1043 = vpop.permute.xlu0 %1042
        %v1045 = vmul.f32 %v1038, %v1043
        %1047 = vrot.lane.b32.xlu0 %v1045, 32
        %v1048 = vpop.permute.xlu0 %1047
        %v1050 = vadd.f32 %v1040, %v1048
        %v1051 = vtanh.pop %v1050
        %1053 = vrot.lane.b32.xlu0 %v1051, 64
        %v1054 = vpop.permute.xlu0 %1053
        %v1056 = vmul.f32 %v1038, %v1054
        %1058 = vrot.lane.b32.xlu0 %v437, 64
        %v1059 = vpop.permute.xlu0 %1058
        %1061 = vrot.lane.b32.xlu0 %v541, 96
        %v1062 = vpop.permute.xlu0 %1061
        %1065 = vrot.lane.b32.xlu0 %v853, 64
        %v1066 = vpop.permute.xlu0 %1065
        %1068 = vrot.lane.b32.xlu0 %v957, 96
        %v1069 = vpop.permute.xlu0 %1068
        %v1071 = vsel %vm230, %v335, %v1059
        %vm1072 = vcmask 523264
        %v1073 = vsel %vm1072, %v1071, %v1062
        %vm1074 = vcmask 785408
        %v1075 = vsel %vm1074, %v1073, %v640
        %v1076 = vsel %vm230, %v751, %v1066
        %v1077 = vsel %vm1072, %v1076, %v1069
        %v1078 = vsel %vm1074, %v1077, %v1056
        %v1081 = vcombine.low %v1075, %v1078
        %v1083 = vunpack.c.l.s4 1966171168
        %v1084 = vunpack.c.0.s8 %v1083
        %v1085 = vlaneseq
        %v1086 = vshrl.u32 %v1085, 7
        %v1087 = vsub.s32 %v1084, %v1086
        %v1088 = vrot.slane %v1081, %v1087
        %v1090 = vunpack.c.l.s4 1966171168
        %v1091 = vunpack.c.0.s8 %v1090
        %v1092 = vlaneseq
        %v1093 = vshrl.u32 %v1092, 7
        %v1094 = vsub.s32 %v1091, %v1093
        %v1095 = vrot.slane %v1088, %v1094
        %v1097 = vlaneseq
        %vm1098 = vcmp.ge.s32.totalorder %v1097, 0
        %vm1099 = vcmp.lt.s32.totalorder %v1097, 256
        %vm1100 = vmand %vm1098, %vm1099
        %1101 = vst.msk [vmem:[%s187] sm:$0x3] %vm1100, %v1095
        %v1103 = vlaneseq
        %v1104 = vshrl.u32 %v1103, 7
        %v1105 = vsub.s32 0, %v1104
        %v1106 = vrot.slane %v1050, %v1105
        %1107 = vrot.lane.b32.xlu0 %v1106, 96
        %v1108 = vpop.permute.xlu0 %1107
        %vm1110 = vcmask 253952
        %1111 = vst.msk [vmem:[%s193] sm:$0x1] %vm1110, %v1108
        %s1112 = sand.u32 %s78, 1
        %s1113 = scalar_lea.sflag [#allocation6], %s1112
        %s1114 = sand.u32 %s78, 1
        %s1115 = smul.addr %s1114, 2
        %s1116 = scalar_lea.vmem [#allocation9], %s1115
        %s1117 = sand.u32 %s104, 1
        %s1118 = scalar_lea.sflag [#allocation11], %s1117
        %s1119 = sand.u32 %s104, 1
        %s1120 = scalar_lea.vmem [#allocation10], %s1119
        // Predicated region
        $region37: #{tpu_custom_call.1} parent=27 // pred_check
          %p1121 = pneg %p88
        $region38: #{tpu_custom_call.1} parent=27 // pred_check_branch
          %1123 = sbr.rel (%p1121) target = $region40
        $region39: #{tpu_custom_call.1} parent=27 // pred_region
          %s1125 = ssub.s32 32, 32
          %1126 = vsyncadd %s1113, %s1125
          %s1127 = smul.addr %s28, 2
          %s1128 = smul.addr %s1127, 16
          %s1129 = scalar_lea.hbm %s3, %s1128
          %s1131 = sshll.u32 %s1116, 4
          %s1132 = int_to_ptr.vmem [resolvable:$true] %s1131
          %1134 = dma.vmem_to_hbm [thread:$0]  %s1132, 32, %s1129, %s1113
        $region40: #{tpu_custom_call.1} parent=27 // pred_fallthru
          _
        // Predicated region
        $region41: #{tpu_custom_call.1} parent=27 // pred_check
          %p1135 = pneg %p114
        $region42: #{tpu_custom_call.1} parent=27 // pred_check_branch
          %1137 = sbr.rel (%p1135) target = $region44
        $region43: #{tpu_custom_call.1} parent=27 // pred_region
          %s1139 = ssub.s32 16, 16
          %1140 = vsyncadd %s1118, %s1139
          %s1141 = smul.addr %s28, 16
          %s1142 = scalar_lea.hbm %s4, %s1141
          %s1144 = sshll.u32 %s1120, 4
          %s1145 = int_to_ptr.vmem [resolvable:$true] %s1144
          %1147 = dma.vmem_to_hbm [thread:$0]  %s1145, 16, %s1142, %s1118
        $region44: #{tpu_custom_call.1} parent=27 // pred_fallthru
          _
      $region28: #{tpu_custom_call.1} parent=5 // pred_fallthru
        _
      %p1148 = scmp.le.s32.totalorder 2, %s23
      // Predicated region
      $region45: #{tpu_custom_call.1} parent=5 // pred_check
        %p1149 = pneg %p1148
      $region46: #{tpu_custom_call.1} parent=5 // pred_check_branch
        %1151 = sbr.rel (%p1149) target = $region48
      $region47: #{tpu_custom_call.1} parent=5 // pred_region
        %s1152 = ssub.s32 %s23, 2
        // Predicated region
        $region49: #{tpu_custom_call.1} parent=47 // pred_check
          %p1153 = pneg %p94
        $region50: #{tpu_custom_call.1} parent=47 // pred_check_branch
          %1155 = sbr.rel (%p1153) target = $region52
        $region51: #{tpu_custom_call.1} parent=47 // pred_region
          %s1156 = sand.u32 %s79, 1
          %s1157 = scalar_lea.sflag [#allocation6], %s1156
          %s1158 = sand.u32 %s79, 1
          %s1159 = smul.addr %s1158, 2
          %s1160 = scalar_lea.vmem [#allocation9], %s1159
          %1161 = dma.done %s1157, 32
        $region52: #{tpu_custom_call.1} parent=47 // pred_fallthru
          _
        // Predicated region
        $region53: #{tpu_custom_call.1} parent=47 // pred_check
          %p1162 = pneg %p120
        $region54: #{tpu_custom_call.1} parent=47 // pred_check_branch
          %1164 = sbr.rel (%p1162) target = $region56
        $region55: #{tpu_custom_call.1} parent=47 // pred_region
          %s1165 = sand.u32 %s105, 1
          %s1166 = scalar_lea.sflag [#allocation11], %s1165
          %s1167 = sand.u32 %s105, 1
          %s1168 = scalar_lea.vmem [#allocation10], %s1167
          %1169 = dma.done %s1166, 16
        $region56: #{tpu_custom_call.1} parent=47 // pred_fallthru
          _
      $region48: #{tpu_custom_call.1} parent=5 // pred_fallthru
        _
    $region6: #{tpu_custom_call.1} parent=1 // loop_footer
      %s27 = sadd.s32 1, %s23
    $region7: #{tpu_custom_call.1} parent=1 // loop_footer_branch
      %22 = sbr.rel target = $region3
    $region8: #{tpu_custom_call.1} parent=1 // loop_exit
      _
    %1170 = vsyncpa [#allocation5], 1
    %s1171 = scalar_lea.sflag [#allocation5], 1
    %1172 = vsyncpa %s1171, 1
    %1173 = vsyncpa [#allocation8], 1
    %1174 = vsyncpa [#allocation6], 1
    %s1175 = scalar_lea.sflag [#allocation6], 1
    %1176 = vsyncpa %s1175, 1
    %1177 = vsyncpa [#allocation11], 1
    %s1178 = scalar_lea.sflag [#allocation11], 1
    %1179 = vsyncpa %s1178, 1

</llo_original>
